<compile_context>
chip_gen: v7x
topology: tpu7x:2x2x1
jax: 0.10.0
libtpu: 0.0.40
codegen_flags: <defaults>
</compile_context>

<pallas_src>
import functools

import jax
import jax.numpy as jnp
from jax.experimental import pallas as pl
from jax.experimental.pallas import tpu as pltpu


HIDDEN = 256  # fixed by the PyTorch module


def _round_up(x, m):
    return ((x + m - 1) // m) * m


def _actor_kernel(x_ref, w1_ref, b1_ref, w2_ref, b2_ref, w3_ref, b3_ref,
                  o_ref, *, max_action):
    # Layer 1: (TILE_B, S) @ (S, H) + b1 -> ReLU     (Dropout(0.0) == identity)
    x = x_ref[...].astype(jnp.bfloat16)
    h = jnp.dot(x, w1_ref[...], preferred_element_type=jnp.float32)
    h = jnp.maximum(h + b1_ref[...], 0.0)
    # Layer 2: (TILE_B, H) @ (H, H) + b2 -> ReLU
    h = jnp.dot(h.astype(jnp.bfloat16), w2_ref[...],
                preferred_element_type=jnp.float32)
    h = jnp.maximum(h + b2_ref[...], 0.0)
    # Layer 3: (TILE_B, H) @ (H, A) + b3 -> max_action * tanh
    y = jnp.dot(h.astype(jnp.bfloat16), w3_ref[...],
                preferred_element_type=jnp.float32)
    y = y + b3_ref[...]
    o_ref[...] = (max_action * jnp.tanh(y)).astype(o_ref.dtype)


def prepare_actor_params(params):
    """One-time weight prep: (in, out) layout, bf16 weights, (1, out) f32 biases.

    Call once and store the result; do NOT call inside the per-step forward.
    """
    def prep(w, b):
        w = jnp.asarray(w, jnp.bfloat16)
        b = jnp.asarray(b, jnp.float32).reshape(1, -1)
        return w, b

    (w1, b1), (w2, b2), (w3, b3) = params
    return (prep(w1, b1), prep(w2, b2), prep(w3, b3))


def _pick_tile_b(B):
    if B <= 256:
        return _round_up(max(B, 1), 8)
    # Large batch: big tiles to amortize per-step overhead, but keep >= 2 grid
    # steps so both TensorCores on v7x get work.  <= 512 rows keeps the f32
    # hidden activations + double-buffered x/out tiles well under v5e's 16 MiB
    # scoped-VMEM default.
    return max(256, min(512, _round_up((B + 1) // 2, 8)))


def actor_forward(prepared_params, state, max_action):
    """Fused Pallas forward: relu(l1) -> relu(l2) -> max_action * tanh(l3).

    `prepared_params` must come from `prepare_actor_params`.
    """
    (w1, b1), (w2, b2), (w3, b3) = prepared_params
    B, state_dim = state.shape
    hidden = w1.shape[1]
    action_dim = w3.shape[1]

    tile_b = _pick_tile_b(B)
    grid = (pl.cdiv(B, tile_b),)

    flops = 2 * B * (state_dim * hidden + hidden * hidden + hidden * action_dim)
    bytes_accessed = (
        4 * B * state_dim                                   # x (f32)
        + 2 * (state_dim * hidden + hidden * hidden
               + hidden * action_dim)                       # weights (bf16)
        + 4 * (2 * hidden + action_dim)                     # biases (f32)
        + 4 * B * action_dim                                # output (f32)
    )

    # TODO(synk): pass max_action as an SMEM scalar if it must be a traced
    # value; here it is a static Python float baked into the kernel.
    kernel = functools.partial(_actor_kernel, max_action=float(max_action))

    return pl.pallas_call(
        kernel,
        out_shape=jax.ShapeDtypeStruct((B, action_dim), state.dtype),
        grid_spec=pltpu.PrefetchScalarGridSpec(
            num_scalar_prefetch=0,
            grid=grid,
            in_specs=[
                # x tile: last block dim == full array dim (state_dim), legal
                # even when state_dim is not a multiple of 128.
                pl.BlockSpec((tile_b, state_dim), lambda i: (i, 0)),
                # Weights / biases: grid-invariant -> VMEM-resident.
                pl.BlockSpec((state_dim, hidden), lambda i: (0, 0)),   # w1
                pl.BlockSpec((1, hidden), lambda i: (0, 0)),           # b1
                pl.BlockSpec((hidden, hidden), lambda i: (0, 0)),      # w2
                pl.BlockSpec((1, hidden), lambda i: (0, 0)),           # b2
                pl.BlockSpec((hidden, action_dim), lambda i: (0, 0)),  # w3
                pl.BlockSpec((1, action_dim), lambda i: (0, 0)),       # b3
            ],
            out_specs=pl.BlockSpec((tile_b, action_dim), lambda i: (i, 0)),
        ),
        compiler_params=pltpu.CompilerParams(
            dimension_semantics=("parallel",),
        ),
        cost_estimate=pl.CostEstimate(
            flops=flops,
            transcendentals=B * action_dim,
            bytes_accessed=bytes_accessed,
        ),
    )(state, w1, b1, w2, b2, w3, b3)


def init_actor_params(key, state_dim, action_dim, hidden=HIDDEN, init_w=None,
                      dtype=jnp.float32):
    """Deterministic init mirroring nn.Linear defaults (+ optional weights_init_ on l3)."""
    def linear_init(k, fan_in, fan_out, bound):
        kw, kb = jax.random.split(k)
        w = jax.random.uniform(kw, (fan_in, fan_out), dtype, -bound, bound)
        b = jax.random.uniform(kb, (1, fan_out), dtype, -bound, bound)
        return w, b

    k1, k2, k3 = jax.random.split(key, 3)
    w1, b1 = linear_init(k1, state_dim, hidden, 1.0 / float(state_dim) ** 0.5)
    w2, b2 = linear_init(k2, hidden, hidden, 1.0 / float(hidden) ** 0.5)
    bound3 = init_w if init_w is not None else 1.0 / float(hidden) ** 0.5
    w3, b3 = linear_init(k3, hidden, action_dim, bound3)
    return [(w1, b1), (w2, b2), (w3, b3)]


def actor_reference(params, state, max_action):
    (w1, b1), (w2, b2), (w3, b3) = params
    h = jnp.maximum(state @ w1 + b1, 0.0)
    h = jnp.maximum(h @ w2 + b2, 0.0)
    return max_action * jnp.tanh(h @ w3 + b3)


if __name__ == "__main__":
    key = jax.random.PRNGKey(0)
    state_dim = 16
    action_dim = 8
    max_action = 2.0

    key, pkey = jax.random.split(key)
    params = init_actor_params(pkey, state_dim, action_dim, init_w=0.003)
    prepared = prepare_actor_params(params)

    # Small primary check (batch=2) + a ragged batch to exercise the cdiv grid.
    for batch in (2, 37):
        key, xkey = jax.random.split(key)
        state = jax.random.normal(xkey, (batch, state_dim), jnp.float32)

        out = actor_forward(prepared, state, max_action)
        jax.block_until_ready(out)

        assert out.shape == (batch, action_dim), out.shape

        ref = actor_reference(params, state, max_action)
        # bf16 matmul inputs (f32 accumulation) => looser tolerance vs f32 ref.
        assert jnp.allclose(out, ref, rtol=2e-2, atol=2e-2), \
            float(jnp.max(jnp.abs(out - ref)))

    print("KERNEL_OK")
</pallas_src>

<mosaic_0001>
module attributes {stable_mosaic.version = 11 : i64} {
  func.func @_actor_kernel(%arg0: i32, %arg1: memref<8x16xf32, #tpu.memory_space<vmem>>, %arg2: memref<16x256xbf16, #tpu.memory_space<vmem>>, %arg3: memref<1x256xf32, #tpu.memory_space<vmem>>, %arg4: memref<256x256xbf16, #tpu.memory_space<vmem>>, %arg5: memref<1x256xf32, #tpu.memory_space<vmem>>, %arg6: memref<256x8xbf16, #tpu.memory_space<vmem>>, %arg7: memref<1x8xf32, #tpu.memory_space<vmem>>, %arg8: memref<8x8xf32, #tpu.memory_space<vmem>>) attributes {dimension_semantics = [#tpu.dimension_semantics<parallel>], iteration_bounds = array<i64: 1>, scalar_prefetch = 0 : i64, scratch_operands = 0 : i64, tpu.core_type = #tpu.core_type<tc>, window_params = [{transform_indices = @transform_0, window_bounds = array<i64: 8, 16>}, {pipeline_mode = #tpu.pipeline_mode<synchronous>, transform_indices = @transform_1, window_bounds = array<i64: 16, 256>}, {pipeline_mode = #tpu.pipeline_mode<synchronous>, transform_indices = @transform_2, window_bounds = array<i64: 1, 256>}, {pipeline_mode = #tpu.pipeline_mode<synchronous>, transform_indices = @transform_3, window_bounds = array<i64: 256, 256>}, {pipeline_mode = #tpu.pipeline_mode<synchronous>, transform_indices = @transform_4, window_bounds = array<i64: 1, 256>}, {pipeline_mode = #tpu.pipeline_mode<synchronous>, transform_indices = @transform_5, window_bounds = array<i64: 256, 8>}, {pipeline_mode = #tpu.pipeline_mode<synchronous>, transform_indices = @transform_6, window_bounds = array<i64: 1, 8>}, {transform_indices = @transform_7, window_bounds = array<i64: 8, 8>}]} {
    %c0 = arith.constant 0 : index
    %c0_0 = arith.constant 0 : index
    %0 = vector.load %arg1[%c0, %c0_0] : memref<8x16xf32, #tpu.memory_space<vmem>>, vector<8x16xf32>
    %1 = arith.truncf %0 : vector<8x16xf32> to vector<8x16xbf16>
    %c0_1 = arith.constant 0 : index
    %c0_2 = arith.constant 0 : index
    %2 = vector.load %arg2[%c0_1, %c0_2] : memref<16x256xbf16, #tpu.memory_space<vmem>>, vector<16x256xbf16>
    %cst = arith.constant dense<0.000000e+00> : vector<8x256xf32>
    %3 = tpu.matmul %1, %2, %cst {dimension_numbers = #tpu.dot_dimension_numbers<[1], [0], [0], [1], [0, 0, 1, 1], [], []>} : vector<8x16xbf16>, vector<16x256xbf16>, vector<8x256xf32> -> vector<8x256xf32>
    %c0_3 = arith.constant 0 : index
    %c0_4 = arith.constant 0 : index
    %4 = vector.load %arg3[%c0_3, %c0_4] : memref<1x256xf32, #tpu.memory_space<vmem>>, vector<1x256xf32>
    %5 = vector.broadcast %4 : vector<1x256xf32> to vector<8x256xf32>
    %6 = arith.addf %3, %5 : vector<8x256xf32>
    %cst_5 = arith.constant 0.000000e+00 : f32
    %7 = vector.broadcast %cst_5 : f32 to vector<8x256xf32>
    %8 = arith.maximumf %6, %7 : vector<8x256xf32>
    %9 = arith.truncf %8 : vector<8x256xf32> to vector<8x256xbf16>
    %c0_6 = arith.constant 0 : index
    %c0_7 = arith.constant 0 : index
    %10 = vector.load %arg4[%c0_6, %c0_7] : memref<256x256xbf16, #tpu.memory_space<vmem>>, vector<256x256xbf16>
    %cst_8 = arith.constant dense<0.000000e+00> : vector<8x256xf32>
    %11 = tpu.matmul %9, %10, %cst_8 {dimension_numbers = #tpu.dot_dimension_numbers<[1], [0], [0], [1], [0, 0, 1, 1], [], []>} : vector<8x256xbf16>, vector<256x256xbf16>, vector<8x256xf32> -> vector<8x256xf32>
    %c0_9 = arith.constant 0 : index
    %c0_10 = arith.constant 0 : index
    %12 = vector.load %arg5[%c0_9, %c0_10] : memref<1x256xf32, #tpu.memory_space<vmem>>, vector<1x256xf32>
    %13 = vector.broadcast %12 : vector<1x256xf32> to vector<8x256xf32>
    %14 = arith.addf %11, %13 : vector<8x256xf32>
    %cst_11 = arith.constant 0.000000e+00 : f32
    %15 = vector.broadcast %cst_11 : f32 to vector<8x256xf32>
    %16 = arith.maximumf %14, %15 : vector<8x256xf32>
    %17 = arith.truncf %16 : vector<8x256xf32> to vector<8x256xbf16>
    %c0_12 = arith.constant 0 : index
    %c0_13 = arith.constant 0 : index
    %18 = vector.load %arg6[%c0_12, %c0_13] : memref<256x8xbf16, #tpu.memory_space<vmem>>, vector<256x8xbf16>
    %cst_14 = arith.constant dense<0.000000e+00> : vector<8x8xf32>
    %19 = tpu.matmul %17, %18, %cst_14 {dimension_numbers = #tpu.dot_dimension_numbers<[1], [0], [0], [1], [0, 0, 1, 1], [], []>} : vector<8x256xbf16>, vector<256x8xbf16>, vector<8x8xf32> -> vector<8x8xf32>
    %c0_15 = arith.constant 0 : index
    %c0_16 = arith.constant 0 : index
    %20 = vector.load %arg7[%c0_15, %c0_16] : memref<1x8xf32, #tpu.memory_space<vmem>>, vector<1x8xf32>
    %21 = vector.broadcast %20 : vector<1x8xf32> to vector<8x8xf32>
    %22 = arith.addf %19, %21 : vector<8x8xf32>
    %23 = math.tanh %22 : vector<8x8xf32>
    %cst_17 = arith.constant 2.000000e+00 : f32
    %24 = vector.broadcast %cst_17 : f32 to vector<8x8xf32>
    %25 = arith.mulf %24, %23 : vector<8x8xf32>
    %c0_18 = arith.constant 0 : index
    %c0_19 = arith.constant 0 : index
    %26 = vector.load %arg8[%c0_18, %c0_19] : memref<8x8xf32, #tpu.memory_space<vmem>>, vector<8x8xf32>
    tpu.vector_store %arg8[%c0_18, %c0_19], %25 {strides = array<i32>} : memref<8x8xf32, #tpu.memory_space<vmem>>, vector<8x8xf32>,
    return
  }
  func.func @transform_0(%arg0: i32) -> (i32, i32) {
    %c0_i32 = arith.constant 0 : i32
    %c0_i32_0 = arith.constant 0 : i32
    return %arg0, %c0_i32 : i32, i32
  }
  func.func @transform_1(%arg0: i32) -> (i32, i32) {
    %c0_i32 = arith.constant 0 : i32
    %c0_i32_0 = arith.constant 0 : i32
    %c0_i32_1 = arith.constant 0 : i32
    return %c0_i32, %c0_i32_0 : i32, i32
  }
  func.func @transform_2(%arg0: i32) -> (i32, i32) {
    %c0_i32 = arith.constant 0 : i32
    %c0_i32_0 = arith.constant 0 : i32
    %c0_i32_1 = arith.constant 0 : i32
    return %c0_i32, %c0_i32_0 : i32, i32
  }
  func.func @transform_3(%arg0: i32) -> (i32, i32) {
    %c0_i32 = arith.constant 0 : i32
    %c0_i32_0 = arith.constant 0 : i32
    %c0_i32_1 = arith.constant 0 : i32
    return %c0_i32, %c0_i32_0 : i32, i32
  }
  func.func @transform_4(%arg0: i32) -> (i32, i32) {
    %c0_i32 = arith.constant 0 : i32
    %c0_i32_0 = arith.constant 0 : i32
    %c0_i32_1 = arith.constant 0 : i32
    return %c0_i32, %c0_i32_0 : i32, i32
  }
  func.func @transform_5(%arg0: i32) -> (i32, i32) {
    %c0_i32 = arith.constant 0 : i32
    %c0_i32_0 = arith.constant 0 : i32
    %c0_i32_1 = arith.constant 0 : i32
    return %c0_i32, %c0_i32_0 : i32, i32
  }
  func.func @transform_6(%arg0: i32) -> (i32, i32) {
    %c0_i32 = arith.constant 0 : i32
    %c0_i32_0 = arith.constant 0 : i32
    %c0_i32_1 = arith.constant 0 : i32
    return %c0_i32, %c0_i32_0 : i32, i32
  }
  func.func @transform_7(%arg0: i32) -> (i32, i32) {
    %c0_i32 = arith.constant 0 : i32
    %c0_i32_0 = arith.constant 0 : i32
    return %arg0, %c0_i32 : i32, i32
  }
}

</mosaic_0001>

<llo_original>
// kernel: tpu_custom_call.1
$region0: #{tpu_custom_call.1}
  #allocation0 [shape = 'u32[]', space=smem, size = 0x4, offset = 0x4, fixed_abs, tag = 'smem constant byte address 0x4 - core index']
  #allocation1 [shape = 'u32[144,128]{1,0:T(1,128)}', space=vmem, size = 0x12000, scoped, tag = 'internal scratch']
  %s0 = inlined_call_operand.vmem [shape: f32[2,16], index: 0, kind: input, shape index: {}]
  %s1 = inlined_call_operand.vmem [shape: bf16[16,256], index: 1, kind: input, shape index: {}]
  %s2 = inlined_call_operand.vmem [shape: f32[1,256], index: 2, kind: input, shape index: {}]
  %s3 = inlined_call_operand.hbm [shape: bf16[256,256], index: 3, kind: input, shape index: {}]
  %s4 = inlined_call_operand.vmem [shape: f32[1,256], index: 4, kind: input, shape index: {}]
  %s5 = inlined_call_operand.vmem [shape: bf16[256,8], index: 5, kind: input, shape index: {}]
  %s6 = inlined_call_operand.vmem [shape: f32[1,8], index: 6, kind: input, shape index: {}]
  %s7 = inlined_call_operand.hbm [shape: f32[2,8], index: 7, kind: output, shape index: {}]
  %s8 = sld [smem:[#allocation0]]
  $region42: #{tpu_custom_call.1} parent=0
    _
  %s10 = ssub.s32 1, %s8
  %s11 = scalar_select 0, %s10, %s8
  $region1: #{tpu_custom_call.1} parent=0
    #allocation2 [shape = 'u8[131072]{0}', space=vmem, size = 0x20000, scoped, tag = 'input window, operand 3, single buffered']
    #allocation3 [shape = 's32[1]{0}', space=sflag, size = 0x4, scoped, tag = 'scoped memory for tpu_custom_call.1']
    #allocation4 [shape = 's32[1]{0}', space=sflag, size = 0x4, scoped, tag = 'scoped memory for tpu_custom_call.1']
    #allocation5 [shape = 'u8[4096]{0}', space=vmem, size = 0x1000, scoped, tag = 'output window, operand 0, single buffered']
    %12 = vsyncpa [#allocation3], 0
    %13 = vsyncpa [#allocation4], 0
    // Predicated region
    $region2: #{tpu_custom_call.1} parent=1 // pred_check
      _
    $region3: #{tpu_custom_call.1} parent=1 // pred_check_branch
      %15 = sbr.rel (0) target = $region5
    $region4: #{tpu_custom_call.1} parent=1 // pred_region
      _
    $region5: #{tpu_custom_call.1} parent=1 // pred_fallthru
      _
    // Predicated region
    $region6: #{tpu_custom_call.1} parent=1 // pred_check
      _
    $region7: #{tpu_custom_call.1} parent=1 // pred_check_branch
      %17 = sbr.rel (0) target = $region9
    $region8: #{tpu_custom_call.1} parent=1 // pred_region
      _
    $region9: #{tpu_custom_call.1} parent=1 // pred_fallthru
      _
    // Predicated region
    $region10: #{tpu_custom_call.1} parent=1 // pred_check
      _
    $region11: #{tpu_custom_call.1} parent=1 // pred_check_branch
      %19 = sbr.rel (0) target = $region13
    $region12: #{tpu_custom_call.1} parent=1 // pred_region
      _
    $region13: #{tpu_custom_call.1} parent=1 // pred_fallthru
      _
    // Predicated region
    $region14: #{tpu_custom_call.1} parent=1 // pred_check
      _
    $region15: #{tpu_custom_call.1} parent=1 // pred_check_branch
      %21 = sbr.rel (0) target = $region17
    $region16: #{tpu_custom_call.1} parent=1 // pred_region
      %s23 = ssub.s32 4096, 4096
      %24 = vsyncadd [#allocation3], %s23
      %s25 = sshll.u32 [#allocation2], 4
      %s26 = int_to_ptr.vmem [resolvable:$true] %s25
      %31 = dma.hbm_to_vmem [thread:$0]  %s3, 4096, %s26, [#allocation3], 128, 128, 8
    $region17: #{tpu_custom_call.1} parent=1 // pred_fallthru
      _
    // Predicated region
    $region18: #{tpu_custom_call.1} parent=1 // pred_check
      _
    $region19: #{tpu_custom_call.1} parent=1 // pred_check_branch
      %33 = sbr.rel (0) target = $region21
    $region20: #{tpu_custom_call.1} parent=1 // pred_region
      _
    $region21: #{tpu_custom_call.1} parent=1 // pred_fallthru
      _
    // Predicated region
    $region22: #{tpu_custom_call.1} parent=1 // pred_check
      _
    $region23: #{tpu_custom_call.1} parent=1 // pred_check_branch
      %35 = sbr.rel (0) target = $region25
    $region24: #{tpu_custom_call.1} parent=1 // pred_region
      _
    $region25: #{tpu_custom_call.1} parent=1 // pred_fallthru
      _
    // Predicated region
    $region26: #{tpu_custom_call.1} parent=1 // pred_check
      _
    $region27: #{tpu_custom_call.1} parent=1 // pred_check_branch
      %37 = sbr.rel (0) target = $region29
    $region28: #{tpu_custom_call.1} parent=1 // pred_region
      _
    $region29: #{tpu_custom_call.1} parent=1 // pred_fallthru
      _
    // Predicated region
    $region30: #{tpu_custom_call.1} parent=1 // pred_check
      _
    $region31: #{tpu_custom_call.1} parent=1 // pred_check_branch
      %39 = sbr.rel (0) target = $region33
    $region32: #{tpu_custom_call.1} parent=1 // pred_region
      %40 = dma.done [#allocation3], 4096
    $region33: #{tpu_custom_call.1} parent=1 // pred_fallthru
      _
    %v42 = vld [vmem:[%s0] sm:$0xff]
    %v43 = vpack.c.bf16 %v42, %v42
    %v44 = vld [vmem:[%s1] sm:$0xff]
    %v45 = vld [vmem:[%s1 + $0x8] sm:$0xff]
    %v46 = vld [vmem:[%s2] sm:$0x3]
    %v48 = vlaneseq
    %v49 = vshrl.u32 %v48, 7
    %v50 = vsub.s32 0, %v49
    %v51 = vrot.slane %v46, %v50
    %v52 = vlaneseq
    %v53 = vshrl.u32 %v52, 7
    %v54 = vsub.s32 1, %v53
    %v55 = vrot.slane %v46, %v54
    %v60 = vunpack.c.l.b16 %v44
    %v61 = vunpack.c.h.b16 %v44
    %v62 = vunpack.c.l.b16 %v45
    %v63 = vunpack.c.h.b16 %v45
    %v64 = vpack.c.b16 %v62, %v60
    %v65 = vpack.c.b16 %v63, %v61
    %vm68 = vcmask 130048
    %v70 = vsel %vm68, %v43, 0
    %72 = vmatprep.subr.bf16.mxu0 %v65
    %73 = vmatpush1.bf16.msra.mxu0 %v64
    %74 = vmatprep.subr.bf16.mxu0 0
    %75 = vmatpush1.bf16.msra.mxu0 0
    %76 = vmatprep.subr.bf16.mxu0 0
    %77 = vmatpush1.bf16.msra.mxu0 0
    %78 = vmatprep.subr.bf16.mxu0 0
    %79 = vmatpush1.bf16.msra.mxu0 0
    %80 = vmatprep.subr.bf16.mxu0 0
    %81 = vmatpush1.bf16.msra.mxu0 0
    %82 = vmatprep.subr.bf16.mxu0 0
    %83 = vmatpush1.bf16.msra.mxu0 0
    %84 = vmatprep.subr.bf16.mxu0 0
    %85 = vmatpush1.bf16.msra.mxu0 0
    %86 = vmatprep.subr.bf16.mxu0 0
    %87 = vmatpush1.bf16.msra.mxu0 0
    %88 = vmatprep.subr.bf16.mxu0 0
    %89 = vmatpush1.bf16.msra.mxu0 0
    %90 = vmatprep.subr.bf16.mxu0 0
    %91 = vmatpush1.bf16.msra.mxu0 0
    %92 = vmatprep.subr.bf16.mxu0 0
    %93 = vmatpush1.bf16.msra.mxu0 0
    %94 = vmatprep.subr.bf16.mxu0 0
    %95 = vmatpush1.bf16.msra.mxu0 0
    %96 = vmatprep.subr.bf16.mxu0 0
    %97 = vmatpush1.bf16.msra.mxu0 0
    %98 = vmatprep.subr.bf16.mxu0 0
    %99 = vmatpush1.bf16.msra.mxu0 0
    %100 = vmatprep.subr.bf16.mxu0 0
    %101 = vmatpush1.bf16.msra.mxu0 0
    %102 = vmatprep.subr.bf16.mxu0 0
    %103 = vmatpush1.bf16.msra.mxu0 0
    %104 = vmatprep.mubr.bf16.mxu0 0
    %105 = vmatmul.mubr.bf16.gmra.mrb[0].mxu0 %v70
    %v106 = vpop.f32.mrb[0].mxu0
    %v107 = vadd.f32 %v51, %v106
    %v108 = vpop.f32.mrb[0].mxu0
    %v109 = vadd.f32 %v55, %v108
    %v110 = vpop.f32.mrb[0].mxu0
    %v111 = vpop.f32.mrb[0].mxu0
    %112 = vdwg.mxu0
    %v113 = vmax.f32 %v107, 0.0
    %v114 = vmax.f32 %v109, 0.0
    %v115 = vpack.c.bf16 %v113, %v113
    %v116 = vpack.c.bf16 %v114, %v114
    %v117 = vld [vmem:[#allocation2] sm:$0xff]
    %v118 = vld [vmem:[#allocation2 + $0x8] sm:$0xff]
    %v119 = vld [vmem:[#allocation2 + $0x10] sm:$0xff]
    %v120 = vld [vmem:[#allocation2 + $0x18] sm:$0xff]
    %v121 = vld [vmem:[#allocation2 + $0x20] sm:$0xff]
    %v122 = vld [vmem:[#allocation2 + $0x28] sm:$0xff]
    %v123 = vld [vmem:[#allocation2 + $0x30] sm:$0xff]
    %v124 = vld [vmem:[#allocation2 + $0x38] sm:$0xff]
    %v125 = vld [vmem:[#allocation2 + $0x40] sm:$0xff]
    %v126 = vld [vmem:[#allocation2 + $0x48] sm:$0xff]
    %v127 = vld [vmem:[#allocation2 + $0x50] sm:$0xff]
    %v128 = vld [vmem:[#allocation2 + $0x58] sm:$0xff]
    %v129 = vld [vmem:[#allocation2 + $0x60] sm:$0xff]
    %v130 = vld [vmem:[#allocation2 + $0x68] sm:$0xff]
    %v131 = vld [vmem:[#allocation2 + $0x70] sm:$0xff]
    %v132 = vld [vmem:[#allocation2 + $0x78] sm:$0xff]
    %v133 = vld [vmem:[#allocation2 + $0x80] sm:$0xff]
    %v134 = vld [vmem:[#allocation2 + $0x88] sm:$0xff]
    %v135 = vld [vmem:[#allocation2 + $0x90] sm:$0xff]
    %v136 = vld [vmem:[#allocation2 + $0x98] sm:$0xff]
    %v137 = vld [vmem:[#allocation2 + $0xa0] sm:$0xff]
    %v138 = vld [vmem:[#allocation2 + $0xa8] sm:$0xff]
    %v139 = vld [vmem:[#allocation2 + $0xb0] sm:$0xff]
    %v140 = vld [vmem:[#allocation2 + $0xb8] sm:$0xff]
    %v141 = vld [vmem:[#allocation2 + $0xc0] sm:$0xff]
    %v142 = vld [vmem:[#allocation2 + $0xc8] sm:$0xff]
    %v143 = vld [vmem:[#allocation2 + $0xd0] sm:$0xff]
    %v144 = vld [vmem:[#allocation2 + $0xd8] sm:$0xff]
    %v145 = vld [vmem:[#allocation2 + $0xe0] sm:$0xff]
    %v146 = vld [vmem:[#allocation2 + $0xe8] sm:$0xff]
    %v147 = vld [vmem:[#allocation2 + $0xf0] sm:$0xff]
    %v148 = vld [vmem:[#allocation2 + $0xf8] sm:$0xff]
    %v149 = vld [vmem:[%s4] sm:$0x3]
    %v151 = vlaneseq
    %v152 = vshrl.u32 %v151, 7
    %v153 = vsub.s32 0, %v152
    %v154 = vrot.slane %v149, %v153
    %v155 = vlaneseq
    %v156 = vshrl.u32 %v155, 7
    %v157 = vsub.s32 1, %v156
    %v158 = vrot.slane %v149, %v157
    %v193 = vunpack.c.l.b16 %v117
    %v194 = vunpack.c.h.b16 %v117
    %v195 = vunpack.c.l.b16 %v118
    %v196 = vunpack.c.h.b16 %v118
    %v197 = vunpack.c.l.b16 %v119
    %v198 = vunpack.c.h.b16 %v119
    %v199 = vunpack.c.l.b16 %v120
    %v200 = vunpack.c.h.b16 %v120
    %v201 = vunpack.c.l.b16 %v121
    %v202 = vunpack.c.h.b16 %v121
    %v203 = vunpack.c.l.b16 %v122
    %v204 = vunpack.c.h.b16 %v122
    %v205 = vunpack.c.l.b16 %v123
    %v206 = vunpack.c.h.b16 %v123
    %v207 = vunpack.c.l.b16 %v124
    %v208 = vunpack.c.h.b16 %v124
    %v209 = vunpack.c.l.b16 %v125
    %v210 = vunpack.c.h.b16 %v125
    %v211 = vunpack.c.l.b16 %v126
    %v212 = vunpack.c.h.b16 %v126
    %v213 = vunpack.c.l.b16 %v127
    %v214 = vunpack.c.h.b16 %v127
    %v215 = vunpack.c.l.b16 %v128
    %v216 = vunpack.c.h.b16 %v128
    %v217 = vunpack.c.l.b16 %v129
    %v218 = vunpack.c.h.b16 %v129
    %v219 = vunpack.c.l.b16 %v130
    %v220 = vunpack.c.h.b16 %v130
    %v221 = vunpack.c.l.b16 %v131
    %v222 = vunpack.c.h.b16 %v131
    %v223 = vunpack.c.l.b16 %v132
    %v224 = vunpack.c.h.b16 %v132
    %v225 = vunpack.c.l.b16 %v133
    %v226 = vunpack.c.h.b16 %v133
    %v227 = vunpack.c.l.b16 %v134
    %v228 = vunpack.c.h.b16 %v134
    %v229 = vunpack.c.l.b16 %v135
    %v230 = vunpack.c.h.b16 %v135
    %v231 = vunpack.c.l.b16 %v136
    %v232 = vunpack.c.h.b16 %v136
    %v233 = vunpack.c.l.b16 %v137
    %v234 = vunpack.c.h.b16 %v137
    %v235 = vunpack.c.l.b16 %v138
    %v236 = vunpack.c.h.b16 %v138
    %v237 = vunpack.c.l.b16 %v139
    %v238 = vunpack.c.h.b16 %v139
    %v239 = vunpack.c.l.b16 %v140
    %v240 = vunpack.c.h.b16 %v140
    %v241 = vunpack.c.l.b16 %v141
    %v242 = vunpack.c.h.b16 %v141
    %v243 = vunpack.c.l.b16 %v142
    %v244 = vunpack.c.h.b16 %v142
    %v245 = vunpack.c.l.b16 %v143
    %v246 = vunpack.c.h.b16 %v143
    %v247 = vunpack.c.l.b16 %v144
    %v248 = vunpack.c.h.b16 %v144
    %v249 = vunpack.c.l.b16 %v145
    %v250 = vunpack.c.h.b16 %v145
    %v251 = vunpack.c.l.b16 %v146
    %v252 = vunpack.c.h.b16 %v146
    %v253 = vunpack.c.l.b16 %v147
    %v254 = vunpack.c.h.b16 %v147
    %v255 = vunpack.c.l.b16 %v148
    %v256 = vunpack.c.h.b16 %v148
    %v257 = vpack.c.b16 %v195, %v193
    %v258 = vpack.c.b16 %v196, %v194
    %v259 = vpack.c.b16 %v199, %v197
    %v260 = vpack.c.b16 %v200, %v198
    %v261 = vpack.c.b16 %v203, %v201
    %v262 = vpack.c.b16 %v204, %v202
    %v263 = vpack.c.b16 %v207, %v205
    %v264 = vpack.c.b16 %v208, %v206
    %v265 = vpack.c.b16 %v211, %v209
    %v266 = vpack.c.b16 %v212, %v210
    %v267 = vpack.c.b16 %v215, %v213
    %v268 = vpack.c.b16 %v216, %v214
    %v269 = vpack.c.b16 %v219, %v217
    %v270 = vpack.c.b16 %v220, %v218
    %v271 = vpack.c.b16 %v223, %v221
    %v272 = vpack.c.b16 %v224, %v222
    %v273 = vpack.c.b16 %v227, %v225
    %v274 = vpack.c.b16 %v228, %v226
    %v275 = vpack.c.b16 %v231, %v229
    %v276 = vpack.c.b16 %v232, %v230
    %v277 = vpack.c.b16 %v235, %v233
    %v278 = vpack.c.b16 %v236, %v234
    %v279 = vpack.c.b16 %v239, %v237
    %v280 = vpack.c.b16 %v240, %v238
    %v281 = vpack.c.b16 %v243, %v241
    %v282 = vpack.c.b16 %v244, %v242
    %v283 = vpack.c.b16 %v247, %v245
    %v284 = vpack.c.b16 %v248, %v246
    %v285 = vpack.c.b16 %v251, %v249
    %v286 = vpack.c.b16 %v252, %v250
    %v287 = vpack.c.b16 %v255, %v253
    %v288 = vpack.c.b16 %v256, %v254
    %321 = vmatprep.subr.bf16.mxu0 %v258
    %322 = vmatpush1.bf16.msra.mxu0 %v257
    %323 = vmatprep.subr.bf16.mxu0 %v260
    %324 = vmatpush1.bf16.msra.mxu0 %v259
    %325 = vmatprep.subr.bf16.mxu0 %v262
    %326 = vmatpush1.bf16.msra.mxu0 %v261
    %327 = vmatprep.subr.bf16.mxu0 %v264
    %328 = vmatpush1.bf16.msra.mxu0 %v263
    %329 = vmatprep.subr.bf16.mxu0 %v266
    %330 = vmatpush1.bf16.msra.mxu0 %v265
    %331 = vmatprep.subr.bf16.mxu0 %v268
    %332 = vmatpush1.bf16.msra.mxu0 %v267
    %333 = vmatprep.subr.bf16.mxu0 %v270
    %334 = vmatpush1.bf16.msra.mxu0 %v269
    %335 = vmatprep.subr.bf16.mxu0 %v272
    %336 = vmatpush1.bf16.msra.mxu0 %v271
    %337 = vmatprep.subr.bf16.mxu0 %v274
    %338 = vmatpush1.bf16.msra.mxu0 %v273
    %339 = vmatprep.subr.bf16.mxu0 %v276
    %340 = vmatpush1.bf16.msra.mxu0 %v275
    %341 = vmatprep.subr.bf16.mxu0 %v278
    %342 = vmatpush1.bf16.msra.mxu0 %v277
    %343 = vmatprep.subr.bf16.mxu0 %v280
    %344 = vmatpush1.bf16.msra.mxu0 %v279
    %345 = vmatprep.subr.bf16.mxu0 %v282
    %346 = vmatpush1.bf16.msra.mxu0 %v281
    %347 = vmatprep.subr.bf16.mxu0 %v284
    %348 = vmatpush1.bf16.msra.mxu0 %v283
    %349 = vmatprep.subr.bf16.mxu0 %v286
    %350 = vmatpush1.bf16.msra.mxu0 %v285
    %351 = vmatprep.subr.bf16.mxu0 %v288
    %352 = vmatpush1.bf16.msra.mxu0 %v287
    %353 = vmatprep.mubr.bf16.mxu0 %v116
    %354 = vmatmul.mubr.bf16.gmra.mrb[0].mxu0 %v115
    %v355 = vpop.f32.mrb[0].mxu0
    %v356 = vadd.f32 %v154, %v355
    %v357 = vpop.f32.mrb[0].mxu0
    %v358 = vadd.f32 %v158, %v357
    %v359 = vpop.f32.mrb[0].mxu0
    %v360 = vpop.f32.mrb[0].mxu0
    %361 = vdwg.mxu0
    %v362 = vmax.f32 %v356, 0.0
    %v363 = vmax.f32 %v358, 0.0
    %v364 = vpack.c.bf16 %v362, %v362
    %v365 = vpack.c.bf16 %v363, %v363
    %v366 = vld [vmem:[%s5] sm:$0xf]
    %v367 = vld [vmem:[%s5 + $0x4] sm:$0xf]
    %v368 = vld [vmem:[%s5 + $0x8] sm:$0xf]
    %v369 = vld [vmem:[%s5 + $0xc] sm:$0xf]
    %v370 = vld [vmem:[%s5 + $0x10] sm:$0xf]
    %v371 = vld [vmem:[%s5 + $0x14] sm:$0xf]
    %v372 = vld [vmem:[%s5 + $0x18] sm:$0xf]
    %v373 = vld [vmem:[%s5 + $0x1c] sm:$0xf]
    %v374 = vld [vmem:[%s5 + $0x20] sm:$0xf]
    %v375 = vld [vmem:[%s5 + $0x24] sm:$0xf]
    %v376 = vld [vmem:[%s5 + $0x28] sm:$0xf]
    %v377 = vld [vmem:[%s5 + $0x2c] sm:$0xf]
    %v378 = vld [vmem:[%s5 + $0x30] sm:$0xf]
    %v379 = vld [vmem:[%s5 + $0x34] sm:$0xf]
    %v380 = vld [vmem:[%s5 + $0x38] sm:$0xf]
    %v381 = vld [vmem:[%s5 + $0x3c] sm:$0xf]
    %v382 = vld [vmem:[%s5 + $0x40] sm:$0xf]
    %v383 = vld [vmem:[%s5 + $0x44] sm:$0xf]
    %v384 = vld [vmem:[%s5 + $0x48] sm:$0xf]
    %v385 = vld [vmem:[%s5 + $0x4c] sm:$0xf]
    %v386 = vld [vmem:[%s5 + $0x50] sm:$0xf]
    %v387 = vld [vmem:[%s5 + $0x54] sm:$0xf]
    %v388 = vld [vmem:[%s5 + $0x58] sm:$0xf]
    %v389 = vld [vmem:[%s5 + $0x5c] sm:$0xf]
    %v390 = vld [vmem:[%s5 + $0x60] sm:$0xf]
    %v391 = vld [vmem:[%s5 + $0x64] sm:$0xf]
    %v392 = vld [vmem:[%s5 + $0x68] sm:$0xf]
    %v393 = vld [vmem:[%s5 + $0x6c] sm:$0xf]
    %v394 = vld [vmem:[%s5 + $0x70] sm:$0xf]
    %v395 = vld [vmem:[%s5 + $0x74] sm:$0xf]
    %v396 = vld [vmem:[%s5 + $0x78] sm:$0xf]
    %v397 = vld [vmem:[%s5 + $0x7c] sm:$0xf]
    %v398 = vld [vmem:[%s6] sm:$0x1]
    %v400 = vlaneseq
    %v401 = vshrl.u32 %v400, 7
    %v402 = vsub.s32 0, %v401
    %v403 = vrot.slane %v398, %v402
    %v437 = vunpack.c.l.b16 %v366
    %v438 = vunpack.c.l.b16 %v367
    %v439 = vunpack.c.l.b16 %v368
    %v440 = vunpack.c.l.b16 %v369
    %v441 = vunpack.c.l.b16 %v370
    %v442 = vunpack.c.l.b16 %v371
    %v443 = vunpack.c.l.b16 %v372
    %v444 = vunpack.c.l.b16 %v373
    %v445 = vunpack.c.l.b16 %v374
    %v446 = vunpack.c.l.b16 %v375
    %v447 = vunpack.c.l.b16 %v376
    %v448 = vunpack.c.l.b16 %v377
    %v449 = vunpack.c.l.b16 %v378
    %v450 = vunpack.c.l.b16 %v379
    %v451 = vunpack.c.l.b16 %v380
    %v452 = vunpack.c.l.b16 %v381
    %v453 = vunpack.c.l.b16 %v382
    %v454 = vunpack.c.l.b16 %v383
    %v455 = vunpack.c.l.b16 %v384
    %v456 = vunpack.c.l.b16 %v385
    %v457 = vunpack.c.l.b16 %v386
    %v458 = vunpack.c.l.b16 %v387
    %v459 = vunpack.c.l.b16 %v388
    %v460 = vunpack.c.l.b16 %v389
    %v461 = vunpack.c.l.b16 %v390
    %v462 = vunpack.c.l.b16 %v391
    %v463 = vunpack.c.l.b16 %v392
    %v464 = vunpack.c.l.b16 %v393
    %v465 = vunpack.c.l.b16 %v394
    %v466 = vunpack.c.l.b16 %v395
    %v467 = vunpack.c.l.b16 %v396
    %v468 = vunpack.c.l.b16 %v397
    %v469 = vpack.c.b16 %v438, %v437
    %v470 = vpack.c.b16 %v440, %v439
    %v471 = vpack.c.b16 %v442, %v441
    %v472 = vpack.c.b16 %v444, %v443
    %v473 = vpack.c.b16 %v446, %v445
    %v474 = vpack.c.b16 %v448, %v447
    %v475 = vpack.c.b16 %v450, %v449
    %v476 = vpack.c.b16 %v452, %v451
    %v477 = vpack.c.b16 %v454, %v453
    %v478 = vpack.c.b16 %v456, %v455
    %v479 = vpack.c.b16 %v458, %v457
    %v480 = vpack.c.b16 %v460, %v459
    %v481 = vpack.c.b16 %v462, %v461
    %v482 = vpack.c.b16 %v464, %v463
    %v483 = vpack.c.b16 %v466, %v465
    %v484 = vpack.c.b16 %v468, %v467
    %501 = vmatprep.subr.bf16.mxu0 0
    %502 = vmatpush1.bf16.msra.mxu0 %v469
    %503 = vmatprep.subr.bf16.mxu0 0
    %504 = vmatpush1.bf16.msra.mxu0 %v470
    %505 = vmatprep.subr.bf16.mxu0 0
    %506 = vmatpush1.bf16.msra.mxu0 %v471
    %507 = vmatprep.subr.bf16.mxu0 0
    %508 = vmatpush1.bf16.msra.mxu0 %v472
    %509 = vmatprep.subr.bf16.mxu0 0
    %510 = vmatpush1.bf16.msra.mxu0 %v473
    %511 = vmatprep.subr.bf16.mxu0 0
    %512 = vmatpush1.bf16.msra.mxu0 %v474
    %513 = vmatprep.subr.bf16.mxu0 0
    %514 = vmatpush1.bf16.msra.mxu0 %v475
    %515 = vmatprep.subr.bf16.mxu0 0
    %516 = vmatpush1.bf16.msra.mxu0 %v476
    %517 = vmatprep.subr.bf16.mxu0 0
    %518 = vmatpush1.bf16.msra.mxu0 %v477
    %519 = vmatprep.subr.bf16.mxu0 0
    %520 = vmatpush1.bf16.msra.mxu0 %v478
    %521 = vmatprep.subr.bf16.mxu0 0
    %522 = vmatpush1.bf16.msra.mxu0 %v479
    %523 = vmatprep.subr.bf16.mxu0 0
    %524 = vmatpush1.bf16.msra.mxu0 %v480
    %525 = vmatprep.subr.bf16.mxu0 0
    %526 = vmatpush1.bf16.msra.mxu0 %v481
    %527 = vmatprep.subr.bf16.mxu0 0
    %528 = vmatpush1.bf16.msra.mxu0 %v482
    %529 = vmatprep.subr.bf16.mxu0 0
    %530 = vmatpush1.bf16.msra.mxu0 %v483
    %531 = vmatprep.subr.bf16.mxu0 0
    %532 = vmatpush1.bf16.msra.mxu0 %v484
    %533 = vmatprep.mubr.bf16.mxu0 %v365
    %534 = vmatmul.mubr.bf16.gmra.mrb[0].mxu0 %v364
    %v535 = vpop.f32.mrb[0].mxu0
    %v536 = vadd.f32 %v403, %v535
    %v537 = vpop.f32.mrb[0].mxu0
    %v538 = vpop.f32.mrb[0].mxu0
    %v539 = vpop.f32.mrb[0].mxu0
    %540 = vdwg.mxu0
    %v541 = vtanh.pop %v536
    %v542 = vmul.f32 %v541, 2.0
    %vm543 = vcmask 64512
    %544 = vst.msk [vmem:[#allocation5] sm:$0xff] %vm543, %v542
    // Predicated region
    $region34: #{tpu_custom_call.1} parent=1 // pred_check
      _
    $region35: #{tpu_custom_call.1} parent=1 // pred_check_branch
      %546 = sbr.rel (0) target = $region37
    $region36: #{tpu_custom_call.1} parent=1 // pred_region
      %s548 = ssub.s32 128, 32
      %549 = vsyncadd [#allocation4], %s548
      %s550 = sshll.u32 [#allocation5], 4
      %s551 = int_to_ptr.vmem [resolvable:$true] %s550
      %556 = dma.vmem_to_hbm [thread:$0]  %s551, 32, %s7, [#allocation4], 32, 32, 2
    $region37: #{tpu_custom_call.1} parent=1 // pred_fallthru
      _
    // Predicated region
    $region38: #{tpu_custom_call.1} parent=1 // pred_check
      _
    $region39: #{tpu_custom_call.1} parent=1 // pred_check_branch
      %558 = sbr.rel (0) target = $region41
    $region40: #{tpu_custom_call.1} parent=1 // pred_region
      %559 = dma.done [#allocation4], 128
    $region41: #{tpu_custom_call.1} parent=1 // pred_fallthru
      _
    %560 = vsyncpa [#allocation3], 1
    %561 = vsyncpa [#allocation4], 1

</llo_original>
